<compile_context>
chip_gen: v6e
topology: v6e:2x2x1
jax: 0.10.0
libtpu: 0.0.40
codegen_flags: <defaults>
</compile_context>

<pallas_src>
import jax
import jax.numpy as jnp
from jax.experimental import pallas as pl
from jax.experimental.pallas import tpu as pltpu


def _make_kernel(num_logits, vocab):
    """Kernel over one row tile: sums CE losses of `num_logits` tensors per row."""

    def kernel(tgt_ref, *refs):
        logit_refs = refs[:num_logits]
        out_ref = refs[num_logits]

        tgt = tgt_ref[...]                                         # (tm, 1) int32
        tm = tgt.shape[0]
        col = jax.lax.broadcasted_iota(jnp.int32, (tm, vocab), 1)  # (tm, V)
        onehot = col == tgt                                        # shared by all K

        acc = jnp.zeros((tm, 1), jnp.float32)
        for lref in logit_refs:                                    # static unroll over K
            x = lref[...].astype(jnp.float32)                      # (tm, V) f32
            # numerically stable logsumexp over the vocab (lane) axis
            m = jnp.max(x, axis=-1, keepdims=True)                 # XLU reduce
            s = jnp.sum(jnp.exp(x - m), axis=-1, keepdims=True)    # EUP + XLU
            lse = m + jnp.log(s)
            # correct-class logit via iota-compare + masked sum (no dynamic gather)
            correct = jnp.sum(jnp.where(onehot, x, 0.0), axis=-1, keepdims=True)
            acc = acc + (lse - correct)

        out_ref[...] = acc                                         # (tm, 1) per-row loss summed over K

    return kernel


def _choose_tm(n, bytes_per_row, budget_bytes, cap=4096):
    """Largest row tile whose VMEM working set fits the budget."""
    cap_rows = max(8, budget_bytes // max(bytes_per_row, 1))
    cap_rows = min(cap_rows, cap)
    if n <= cap_rows:
        return n                       # single tile spanning all rows (block == full dim)
    tm = (cap_rows // 8) * 8
    while tm >= 8:
        if n % tm == 0:
            return tm
        tm -= 8
    # Fallback: no multiple-of-8 divisor <= cap; use the full row extent
    # (block == full dim is always layout-legal, may exceed the soft budget).
    return n


def fractal_loss(logits, target, *,
                 block_budget_bytes=24 * 1024 * 1024,
                 vmem_limit_bytes=44 * 1024 * 1024):
    """logits: tuple of tuples of arrays [B, T, V]; target: [B, T] int array."""
    assert isinstance(logits, tuple)
    flat = [l for group in logits for l in group]
    K = len(flat)
    b, t, v = flat[0].shape
    n = b * t
    for l in flat:
        assert l.shape == (b, t, v), "all sub-model logits must share (B, T, V)"

    # Free reshapes -- no HBM copy / stacking of the logits.
    flat2d = [l.reshape(n, v) for l in flat]
    tgt = target.reshape(n, 1).astype(jnp.int32)

    itemsize = jnp.dtype(flat[0].dtype).itemsize
    # double-buffered input blocks across all K tensors + ~4 f32 (tm,V) temporaries
    bytes_per_row = 2 * K * v * itemsize + 4 * v * 4
    tm = _choose_tm(n, bytes_per_row, block_budget_bytes)
    assert n % tm == 0
    grid = (n // tm,)

    kernel = _make_kernel(K, v)

    per_row_loss = pl.pallas_call(
        kernel,
        out_shape=jax.ShapeDtypeStruct((n, 1), jnp.float32),
        grid_spec=pltpu.PrefetchScalarGridSpec(
            num_scalar_prefetch=0,
            grid=grid,
            in_specs=[pl.BlockSpec((tm, 1), lambda i: (i, 0))]          # targets
                     + [pl.BlockSpec((tm, v), lambda i: (i, 0))] * K,   # K logit tensors
            out_specs=pl.BlockSpec((tm, 1), lambda i: (i, 0)),
        ),
        compiler_params=pltpu.CompilerParams(
            dimension_semantics=("parallel",),      # distinct output blocks -> megacore-safe
            vmem_limit_bytes=vmem_limit_bytes,
        ),
    )(tgt, *flat2d)

    # per-tensor CE is a mean over N rows; summing K means == total_sum / N
    return jnp.sum(per_row_loss) / n


def _reference_loss(logits, target):
    """Plain-JAX reference (mirrors the PyTorch module)."""
    b, t, v = logits[0][0].shape
    tgt = target.reshape(b * t)
    loss = 0.0
    for group in logits:
        for l in group:
            x = l.reshape(b * t, v).astype(jnp.float32)
            lse = jax.nn.logsumexp(x, axis=-1)
            correct = jnp.take_along_axis(x, tgt[:, None], axis=-1)[:, 0]
            loss = loss + jnp.mean(lse - correct)
    return loss


if __name__ == "__main__":
    key = jax.random.PRNGKey(0)
    B, T, V = 2, 8, 128   # T plays the role of config.max_position_embeddings

    # Fractal structure: level 0 has 1 model, level 1 has 2 sub-models.
    k0, k1, k2, k3 = jax.random.split(key, 4)
    logits = (
        (jax.random.normal(k0, (B, T, V), jnp.float32),),
        (jax.random.normal(k1, (B, T, V), jnp.float32),
         jax.random.normal(k2, (B, T, V), jnp.float32)),
    )
    target = jax.random.randint(k3, (B, T), 0, V, dtype=jnp.int32)

    loss = jax.block_until_ready(fractal_loss(logits, target))
    ref = jax.block_until_ready(_reference_loss(logits, target))
    assert jnp.allclose(loss, ref, rtol=1e-5, atol=1e-5), (loss, ref)
    print("KERNEL_OK")
</pallas_src>

<mosaic_0001>
module attributes {stable_mosaic.version = 11 : i64} {
  func.func @kernel(%arg0: i32, %arg1: memref<16x1xi32, #tpu.memory_space<vmem>>, %arg2: memref<16x128xf32, #tpu.memory_space<vmem>>, %arg3: memref<16x128xf32, #tpu.memory_space<vmem>>, %arg4: memref<16x128xf32, #tpu.memory_space<vmem>>, %arg5: memref<16x1xf32, #tpu.memory_space<vmem>>) attributes {dimension_semantics = [#tpu.dimension_semantics<parallel>], iteration_bounds = array<i64: 1>, scalar_prefetch = 0 : i64, scratch_operands = 0 : i64, tpu.core_type = #tpu.core_type<tc>, window_params = [{transform_indices = @transform_0, window_bounds = array<i64: 16, 1>}, {transform_indices = @transform_1, window_bounds = array<i64: 16, 128>}, {transform_indices = @transform_2, window_bounds = array<i64: 16, 128>}, {transform_indices = @transform_3, window_bounds = array<i64: 16, 128>}, {transform_indices = @transform_4, window_bounds = array<i64: 16, 1>}]} {
    %c0 = arith.constant 0 : index
    %c0_0 = arith.constant 0 : index
    %0 = vector.load %arg1[%c0, %c0_0] : memref<16x1xi32, #tpu.memory_space<vmem>>, vector<16x1xi32>
    %1 = tpu.iota {dimensions = array<i32: 1>} : vector<16x128xi32>
    %2 = vector.broadcast %0 : vector<16x1xi32> to vector<16x128xi32>
    %3 = arith.cmpi eq, %1, %2 : vector<16x128xi32>
    %cst = arith.constant 0.000000e+00 : f32
    %4 = vector.broadcast %cst : f32 to vector<16x1xf32>
    %c0_1 = arith.constant 0 : index
    %c0_2 = arith.constant 0 : index
    %5 = vector.load %arg2[%c0_1, %c0_2] : memref<16x128xf32, #tpu.memory_space<vmem>>, vector<16x128xf32>
    %cst_3 = arith.constant dense<0xFF800000> : vector<16xf32>
    %6 = vector.multi_reduction <maximumf>, %5, %cst_3 [1] : vector<16x128xf32> to vector<16xf32>
    %7 = vector.shape_cast %6 : vector<16xf32> to vector<16x1xf32>
    %8 = vector.broadcast %7 : vector<16x1xf32> to vector<16x128xf32>
    %9 = arith.subf %5, %8 : vector<16x128xf32>
    %10 = math.exp %9 : vector<16x128xf32>
    %cst_4 = arith.constant dense<0.000000e+00> : vector<16xf32>
    %11 = vector.multi_reduction <add>, %10, %cst_4 [1] : vector<16x128xf32> to vector<16xf32>
    %12 = vector.shape_cast %11 : vector<16xf32> to vector<16x1xf32>
    %13 = math.log %12 : vector<16x1xf32>
    %14 = arith.addf %7, %13 : vector<16x1xf32>
    %cst_5 = arith.constant 0.000000e+00 : f32
    %15 = vector.broadcast %cst_5 : f32 to vector<16x128xf32>
    %16 = arith.select %3, %5, %15 : vector<16x128xi1>, vector<16x128xf32>
    %cst_6 = arith.constant dense<0.000000e+00> : vector<16xf32>
    %17 = vector.multi_reduction <add>, %16, %cst_6 [1] : vector<16x128xf32> to vector<16xf32>
    %18 = vector.shape_cast %17 : vector<16xf32> to vector<16x1xf32>
    %19 = arith.subf %14, %18 : vector<16x1xf32>
    %20 = arith.addf %4, %19 : vector<16x1xf32>
    %c0_7 = arith.constant 0 : index
    %c0_8 = arith.constant 0 : index
    %21 = vector.load %arg3[%c0_7, %c0_8] : memref<16x128xf32, #tpu.memory_space<vmem>>, vector<16x128xf32>
    %cst_9 = arith.constant dense<0xFF800000> : vector<16xf32>
    %22 = vector.multi_reduction <maximumf>, %21, %cst_9 [1] : vector<16x128xf32> to vector<16xf32>
    %23 = vector.shape_cast %22 : vector<16xf32> to vector<16x1xf32>
    %24 = vector.broadcast %23 : vector<16x1xf32> to vector<16x128xf32>
    %25 = arith.subf %21, %24 : vector<16x128xf32>
    %26 = math.exp %25 : vector<16x128xf32>
    %cst_10 = arith.constant dense<0.000000e+00> : vector<16xf32>
    %27 = vector.multi_reduction <add>, %26, %cst_10 [1] : vector<16x128xf32> to vector<16xf32>
    %28 = vector.shape_cast %27 : vector<16xf32> to vector<16x1xf32>
    %29 = math.log %28 : vector<16x1xf32>
    %30 = arith.addf %23, %29 : vector<16x1xf32>
    %cst_11 = arith.constant 0.000000e+00 : f32
    %31 = vector.broadcast %cst_11 : f32 to vector<16x128xf32>
    %32 = arith.select %3, %21, %31 : vector<16x128xi1>, vector<16x128xf32>
    %cst_12 = arith.constant dense<0.000000e+00> : vector<16xf32>
    %33 = vector.multi_reduction <add>, %32, %cst_12 [1] : vector<16x128xf32> to vector<16xf32>
    %34 = vector.shape_cast %33 : vector<16xf32> to vector<16x1xf32>
    %35 = arith.subf %30, %34 : vector<16x1xf32>
    %36 = arith.addf %20, %35 : vector<16x1xf32>
    %c0_13 = arith.constant 0 : index
    %c0_14 = arith.constant 0 : index
    %37 = vector.load %arg4[%c0_13, %c0_14] : memref<16x128xf32, #tpu.memory_space<vmem>>, vector<16x128xf32>
    %cst_15 = arith.constant dense<0xFF800000> : vector<16xf32>
    %38 = vector.multi_reduction <maximumf>, %37, %cst_15 [1] : vector<16x128xf32> to vector<16xf32>
    %39 = vector.shape_cast %38 : vector<16xf32> to vector<16x1xf32>
    %40 = vector.broadcast %39 : vector<16x1xf32> to vector<16x128xf32>
    %41 = arith.subf %37, %40 : vector<16x128xf32>
    %42 = math.exp %41 : vector<16x128xf32>
    %cst_16 = arith.constant dense<0.000000e+00> : vector<16xf32>
    %43 = vector.multi_reduction <add>, %42, %cst_16 [1] : vector<16x128xf32> to vector<16xf32>
    %44 = vector.shape_cast %43 : vector<16xf32> to vector<16x1xf32>
    %45 = math.log %44 : vector<16x1xf32>
    %46 = arith.addf %39, %45 : vector<16x1xf32>
    %cst_17 = arith.constant 0.000000e+00 : f32
    %47 = vector.broadcast %cst_17 : f32 to vector<16x128xf32>
    %48 = arith.select %3, %37, %47 : vector<16x128xi1>, vector<16x128xf32>
    %cst_18 = arith.constant dense<0.000000e+00> : vector<16xf32>
    %49 = vector.multi_reduction <add>, %48, %cst_18 [1] : vector<16x128xf32> to vector<16xf32>
    %50 = vector.shape_cast %49 : vector<16xf32> to vector<16x1xf32>
    %51 = arith.subf %46, %50 : vector<16x1xf32>
    %52 = arith.addf %36, %51 : vector<16x1xf32>
    %c0_19 = arith.constant 0 : index
    %c0_20 = arith.constant 0 : index
    %53 = vector.load %arg5[%c0_19, %c0_20] : memref<16x1xf32, #tpu.memory_space<vmem>>, vector<16x1xf32>
    tpu.vector_store %arg5[%c0_19, %c0_20], %52 {strides = array<i32>} : memref<16x1xf32, #tpu.memory_space<vmem>>, vector<16x1xf32>,
    return
  }
  func.func @transform_0(%arg0: i32) -> (i32, i32) {
    %c0_i32 = arith.constant 0 : i32
    %c0_i32_0 = arith.constant 0 : i32
    return %arg0, %c0_i32 : i32, i32
  }
  func.func @transform_1(%arg0: i32) -> (i32, i32) {
    %c0_i32 = arith.constant 0 : i32
    %c0_i32_0 = arith.constant 0 : i32
    return %arg0, %c0_i32 : i32, i32
  }
  func.func @transform_2(%arg0: i32) -> (i32, i32) {
    %c0_i32 = arith.constant 0 : i32
    %c0_i32_0 = arith.constant 0 : i32
    return %arg0, %c0_i32 : i32, i32
  }
  func.func @transform_3(%arg0: i32) -> (i32, i32) {
    %c0_i32 = arith.constant 0 : i32
    %c0_i32_0 = arith.constant 0 : i32
    return %arg0, %c0_i32 : i32, i32
  }
  func.func @transform_4(%arg0: i32) -> (i32, i32) {
    %c0_i32 = arith.constant 0 : i32
    %c0_i32_0 = arith.constant 0 : i32
    return %arg0, %c0_i32 : i32, i32
  }
}

</mosaic_0001>

<llo_original>
// kernel: tpu_custom_call.1
$region0: #{tpu_custom_call.1}
  #allocation0 [shape = 'u32[]', space=smem, size = 0x4, offset = 0x4, fixed_abs, tag = 'smem constant byte address 0x4 - core index']
  #allocation1 [shape = 'u32[144,128]{1,0:T(1,128)}', space=vmem, size = 0x12000, scoped, tag = 'internal scratch']
  %s0 = inlined_call_operand.vmem [shape: s32[16,1], index: 0, kind: input, shape index: {}]
  %s1 = inlined_call_operand.vmem [shape: f32[16,128], index: 1, kind: input, shape index: {}]
  %s2 = inlined_call_operand.hbm [shape: f32[16,128], index: 2, kind: input, shape index: {}]
  %s3 = inlined_call_operand.hbm [shape: f32[16,128], index: 3, kind: input, shape index: {}]
  %s4 = inlined_call_operand.vmem [shape: f32[16,1], index: 4, kind: output, shape index: {}]
  %s5 = sld [smem:[#allocation0]]
  $region34: #{tpu_custom_call.1} parent=0
    _
  %s7 = ssub.s32 1, %s5
  %s8 = scalar_select 0, %s7, %s5
  $region1: #{tpu_custom_call.1} parent=0
    #allocation2 [shape = 'u8[8192]{0}', space=vmem, size = 0x2000, scoped, tag = 'input window, operand 2, single buffered']
    #allocation3 [shape = 's32[1]{0}', space=sflag, size = 0x4, scoped, tag = 'scoped memory for tpu_custom_call.1']
    #allocation4 [shape = 'u8[8192]{0}', space=vmem, size = 0x2000, scoped, tag = 'input window, operand 3, single buffered']
    #allocation5 [shape = 's32[1]{0}', space=sflag, size = 0x4, scoped, tag = 'scoped memory for tpu_custom_call.1']
    %9 = vsyncpa [#allocation3], 0
    %10 = vsyncpa [#allocation5], 0
    // Predicated region
    $region2: #{tpu_custom_call.1} parent=1 // pred_check
      _
    $region3: #{tpu_custom_call.1} parent=1 // pred_check_branch
      %12 = sbr.rel (0) target = $region5
    $region4: #{tpu_custom_call.1} parent=1 // pred_region
      _
    $region5: #{tpu_custom_call.1} parent=1 // pred_fallthru
      _
    // Predicated region
    $region6: #{tpu_custom_call.1} parent=1 // pred_check
      _
    $region7: #{tpu_custom_call.1} parent=1 // pred_check_branch
      %14 = sbr.rel (0) target = $region9
    $region8: #{tpu_custom_call.1} parent=1 // pred_region
      _
    $region9: #{tpu_custom_call.1} parent=1 // pred_fallthru
      _
    // Predicated region
    $region10: #{tpu_custom_call.1} parent=1 // pred_check
      _
    $region11: #{tpu_custom_call.1} parent=1 // pred_check_branch
      %16 = sbr.rel (0) target = $region13
    $region12: #{tpu_custom_call.1} parent=1 // pred_region
      %s18 = ssub.s32 256, 256
      %19 = vsyncadd [#allocation3], %s18
      %s20 = sshll.u32 [#allocation2], 4
      %s21 = int_to_ptr.vmem [resolvable:$true] %s20
      %26 = dma.hbm_to_vmem [thread:$0]  %s2, 256, %s21, [#allocation3], 128, 128, 8
    $region13: #{tpu_custom_call.1} parent=1 // pred_fallthru
      _
    // Predicated region
    $region14: #{tpu_custom_call.1} parent=1 // pred_check
      _
    $region15: #{tpu_custom_call.1} parent=1 // pred_check_branch
      %28 = sbr.rel (0) target = $region17
    $region16: #{tpu_custom_call.1} parent=1 // pred_region
      %s30 = ssub.s32 256, 256
      %31 = vsyncadd [#allocation5], %s30
      %s32 = sshll.u32 [#allocation4], 4
      %s33 = int_to_ptr.vmem [resolvable:$true] %s32
      %38 = dma.hbm_to_vmem [thread:$0]  %s3, 256, %s33, [#allocation5], 128, 128, 8
    $region17: #{tpu_custom_call.1} parent=1 // pred_fallthru
      _
    // Predicated region
    $region18: #{tpu_custom_call.1} parent=1 // pred_check
      _
    $region19: #{tpu_custom_call.1} parent=1 // pred_check_branch
      %40 = sbr.rel (0) target = $region21
    $region20: #{tpu_custom_call.1} parent=1 // pred_region
      %41 = dma.done [#allocation3], 256
    $region21: #{tpu_custom_call.1} parent=1 // pred_fallthru
      _
    // Predicated region
    $region22: #{tpu_custom_call.1} parent=1 // pred_check
      _
    $region23: #{tpu_custom_call.1} parent=1 // pred_check_branch
      %43 = sbr.rel (0) target = $region25
    $region24: #{tpu_custom_call.1} parent=1 // pred_region
      %44 = dma.done [#allocation5], 256
    $region25: #{tpu_custom_call.1} parent=1 // pred_fallthru
      _
    %v45 = vld [vmem:[%s0] sm:$0xff]
    %v46 = vld [vmem:[%s0 + $0x8] sm:$0xff]
    %v47 = vlaneseq
    %v48 = vand.u32 %v47, 127
    %49 = vset.pattern.permute.xlu0 0
    %50 = vperm.xlu0 %49, %v45
    %v51 = vpop.permute.xlu0 %50
    %52 = vset.pattern.permute.xlu0 0
    %53 = vperm.xlu0 %52, %v46
    %v54 = vpop.permute.xlu0 %53
    %vm55 = vcmp.eq.s32.totalorder %v48, %v51
    %vm56 = vcmp.eq.s32.totalorder %v48, %v54
    %v57 = vld [vmem:[%s1] sm:$0xff]
    %v58 = vld [vmem:[%s1 + $0x8] sm:$0xff]
    %59 = vmax.xlane.f32.xlu0 %v57
    %v60 = vpop.xlane.xlu0 %59
    %61 = vmax.xlane.f32.xlu0 %v58
    %v62 = vpop.xlane.xlu0 %61
    %v63 = vsub.f32 %v57, %v60
    %v64 = vsub.f32 %v58, %v62
    %v65 = vmul.f32 %v63, 1.442695
    %v66 = vpow.pop %v65
    %v67 = vmul.f32 %v64, 1.442695
    %v68 = vpow.pop %v67
    %69 = vadd.xlane.f32.xlu0 %v66
    %v70 = vpop.xlane.xlu0 %69
    %71 = vadd.xlane.f32.xlu0 %v68
    %v72 = vpop.xlane.xlu0 %71
    %v73 = vlog2.pop %v70
    %v74 = vmul.f32 %v73, 0.6931472
    %v75 = vlog2.pop %v72
    %v76 = vmul.f32 %v75, 0.6931472
    %v77 = vadd.f32 %v60, %v74
    %v78 = vadd.f32 %v62, %v76
    %v79 = vsel %vm55, %v57, 0.0
    %v80 = vsel %vm56, %v58, 0.0
    %81 = vadd.xlane.f32.xlu0 %v79
    %v82 = vpop.xlane.xlu0 %81
    %83 = vadd.xlane.f32.xlu0 %v80
    %v84 = vpop.xlane.xlu0 %83
    %v85 = vsub.f32 %v77, %v82
    %v86 = vsub.f32 %v78, %v84
    %v87 = vadd.f32 %v85, 0.0
    %v88 = vadd.f32 %v86, 0.0
    %v89 = vld [vmem:[#allocation2] sm:$0xff]
    %v90 = vld [vmem:[#allocation2 + $0x8] sm:$0xff]
    %91 = vmax.xlane.f32.xlu0 %v89
    %v92 = vpop.xlane.xlu0 %91
    %93 = vmax.xlane.f32.xlu0 %v90
    %v94 = vpop.xlane.xlu0 %93
    %v95 = vsub.f32 %v89, %v92
    %v96 = vsub.f32 %v90, %v94
    %v97 = vmul.f32 %v95, 1.442695
    %v98 = vpow.pop %v97
    %v99 = vmul.f32 %v96, 1.442695
    %v100 = vpow.pop %v99
    %101 = vadd.xlane.f32.xlu0 %v98
    %v102 = vpop.xlane.xlu0 %101
    %103 = vadd.xlane.f32.xlu0 %v100
    %v104 = vpop.xlane.xlu0 %103
    %v105 = vlog2.pop %v102
    %v106 = vmul.f32 %v105, 0.6931472
    %v107 = vlog2.pop %v104
    %v108 = vmul.f32 %v107, 0.6931472
    %v109 = vadd.f32 %v92, %v106
    %v110 = vadd.f32 %v94, %v108
    %v111 = vsel %vm55, %v89, 0.0
    %v112 = vsel %vm56, %v90, 0.0
    %113 = vadd.xlane.f32.xlu0 %v111
    %v114 = vpop.xlane.xlu0 %113
    %115 = vadd.xlane.f32.xlu0 %v112
    %v116 = vpop.xlane.xlu0 %115
    %v117 = vsub.f32 %v109, %v114
    %v118 = vsub.f32 %v110, %v116
    %v119 = vadd.f32 %v87, %v117
    %v120 = vadd.f32 %v88, %v118
    %v121 = vld [vmem:[#allocation4] sm:$0xff]
    %v122 = vld [vmem:[#allocation4 + $0x8] sm:$0xff]
    %123 = vmax.xlane.f32.xlu0 %v121
    %v124 = vpop.xlane.xlu0 %123
    %125 = vmax.xlane.f32.xlu0 %v122
    %v126 = vpop.xlane.xlu0 %125
    %v127 = vsub.f32 %v121, %v124
    %v128 = vsub.f32 %v122, %v126
    %v129 = vmul.f32 %v127, 1.442695
    %v130 = vpow.pop %v129
    %v131 = vmul.f32 %v128, 1.442695
    %v132 = vpow.pop %v131
    %133 = vadd.xlane.f32.xlu0 %v130
    %v134 = vpop.xlane.xlu0 %133
    %135 = vadd.xlane.f32.xlu0 %v132
    %v136 = vpop.xlane.xlu0 %135
    %v137 = vlog2.pop %v134
    %v138 = vmul.f32 %v137, 0.6931472
    %v139 = vlog2.pop %v136
    %v140 = vmul.f32 %v139, 0.6931472
    %v141 = vadd.f32 %v124, %v138
    %v142 = vadd.f32 %v126, %v140
    %v143 = vsel %vm55, %v121, 0.0
    %v144 = vsel %vm56, %v122, 0.0
    %145 = vadd.xlane.f32.xlu0 %v143
    %v146 = vpop.xlane.xlu0 %145
    %147 = vadd.xlane.f32.xlu0 %v144
    %v148 = vpop.xlane.xlu0 %147
    %v149 = vsub.f32 %v141, %v146
    %v150 = vsub.f32 %v142, %v148
    %v151 = vadd.f32 %v119, %v149
    %v152 = vadd.f32 %v120, %v150
    %vm153 = vcmask 7168
    %154 = vst.msk [vmem:[%s4] sm:$0xff] %vm153, %v151
    %155 = vst.msk [vmem:[%s4 + $0x8] sm:$0xff] %vm153, %v152
    // Predicated region
    $region26: #{tpu_custom_call.1} parent=1 // pred_check
      _
    $region27: #{tpu_custom_call.1} parent=1 // pred_check_branch
      %157 = sbr.rel (0) target = $region29
    $region28: #{tpu_custom_call.1} parent=1 // pred_region
      _
    $region29: #{tpu_custom_call.1} parent=1 // pred_fallthru
      _
    // Predicated region
    $region30: #{tpu_custom_call.1} parent=1 // pred_check
      _
    $region31: #{tpu_custom_call.1} parent=1 // pred_check_branch
      %159 = sbr.rel (0) target = $region33
    $region32: #{tpu_custom_call.1} parent=1 // pred_region
      _
    $region33: #{tpu_custom_call.1} parent=1 // pred_fallthru
      _
    %160 = vsyncpa [#allocation3], 1
    %161 = vsyncpa [#allocation5], 1

</llo_original>
